<compile_context>
chip_gen: v5e
topology: v5e:2x2
jax: 0.10.0
libtpu: 0.0.40
codegen_flags: <defaults>
</compile_context>

<pallas_src>
import functools

import jax
import jax.numpy as jnp
from jax.experimental import pallas as pl
from jax.experimental.pallas import tpu as pltpu


def _round_up(x, m):
    return (x + m - 1) // m * m


def _decoder_kernel(n_layers, hid_dim,
                    x_ref, h0_ref, c0_ref,
                    w_x0_ref, w_in_ref, w_hh_ref, s_ref, b_ref,
                    w_fc_ref, s_fc_ref, b_fc_ref,
                    pred_ref, h_out_ref, c_out_ref):
    """Single-invocation kernel: all layers of one decode step.

    Weights are int8 (per-output-channel scale applied post-matmul), gates are
    packed contiguously (i,f,g,o) in the first 4*H lanes of each Gp-wide block.
    """
    H = hid_dim
    f32 = jnp.float32
    bf16 = jnp.bfloat16

    def dq(w_i8):
        # int8 weight -> bf16 MXU operand (go via f32; scale applied after dot)
        return w_i8.astype(f32).astype(bf16)

    layer_in = x_ref[...].astype(bf16)              # (Bp, Din0p)

    for l in range(n_layers):                       # static unroll (tiny L)
        w_in_q = w_x0_ref[...] if l == 0 else w_in_ref[l - 1]
        h_prev = h0_ref[l]                          # (Bp, H) f32
        c_prev = c0_ref[l]

        acc = jnp.dot(layer_in, dq(w_in_q), preferred_element_type=f32)
        acc = acc + jnp.dot(h_prev.astype(bf16), dq(w_hh_ref[l]),
                            preferred_element_type=f32)
        gates = acc * s_ref[l] + b_ref[l]           # (Bp, Gp); cols >= 4H unused

        i_g = jax.nn.sigmoid(gates[:, 0 * H:1 * H])
        f_g = jax.nn.sigmoid(gates[:, 1 * H:2 * H])
        g_g = jnp.tanh(gates[:, 2 * H:3 * H])
        o_g = jax.nn.sigmoid(gates[:, 3 * H:4 * H])

        c_new = f_g * c_prev + i_g * g_g
        h_new = o_g * jnp.tanh(c_new)

        h_out_ref[l] = h_new
        c_out_ref[l] = c_new
        layer_in = h_new.astype(bf16)               # reused as fc LHS at the top

    pred_ref[...] = (jnp.dot(layer_in, dq(w_fc_ref[...]),
                             preferred_element_type=f32)
                     * s_fc_ref[...] + b_fc_ref[...])


def _full_block(a):
    nd = a.ndim
    return pl.BlockSpec(a.shape, lambda i, _nd=nd: (0,) * _nd)


@jax.jit
def decoder_forward_padded(x_pad, h_pad, c_pad, kparams):
    """Padded-state entry point.

    x_pad: (Bp, Din0p) f32; h_pad/c_pad: (L, Bp, H) f32.  Returns
    (pred_pad (Bp, Op), h_new (L, Bp, H), c_new (L, Bp, H)).  Autoregressive
    callers should feed h_new/c_new straight back in (no per-step re-padding).
    """
    n_layers, Bp, H = h_pad.shape
    Din0p = x_pad.shape[-1]
    Gp = kparams["b"].shape[-1]
    Op = kparams["b_fc"].shape[-1]

    kernel = functools.partial(_decoder_kernel, n_layers, H)

    args = (x_pad, h_pad, c_pad,
            kparams["w_x0"], kparams["w_in"], kparams["w_hh"],
            kparams["s"], kparams["b"],
            kparams["w_fc"], kparams["s_fc"], kparams["b_fc"])

    in_specs = [_full_block(a) for a in args]
    out_shape = (jax.ShapeDtypeStruct((Bp, Op), jnp.float32),
                 jax.ShapeDtypeStruct((n_layers, Bp, H), jnp.float32),
                 jax.ShapeDtypeStruct((n_layers, Bp, H), jnp.float32))
    out_specs = (pl.BlockSpec((Bp, Op), lambda i: (0, 0)),
                 pl.BlockSpec((n_layers, Bp, H), lambda i: (0, 0, 0)),
                 pl.BlockSpec((n_layers, Bp, H), lambda i: (0, 0, 0)))

    # Advisory cost estimate so XLA overlaps neighbours with this DMA-bound op.
    flops = (2 * Bp * Gp * (Din0p + H)
             + 2 * Bp * Gp * 2 * H * max(n_layers - 1, 0)
             + 2 * Bp * Op * H)
    transcendentals = n_layers * Bp * 5 * H
    bytes_in = sum(int(a.size) * a.dtype.itemsize for a in args)
    bytes_out = (Bp * Op + 2 * n_layers * Bp * H) * 4
    cost = pl.CostEstimate(flops=flops, transcendentals=transcendentals,
                           bytes_accessed=bytes_in + bytes_out)

    pred_p, h_new_p, c_new_p = pl.pallas_call(
        kernel,
        out_shape=out_shape,
        grid=(1,),
        in_specs=in_specs,
        out_specs=out_specs,
        # In-place state update (h_pad -> h_new, c_pad -> c_new).  Each layer's
        # state is read before its aliased slot is written.
        input_output_aliases={1: 1, 2: 2},
        compiler_params=pltpu.CompilerParams(
            dimension_semantics=("arbitrary",),
            vmem_limit_bytes=32 * 1024 * 1024),
        cost_estimate=cost,
    )(*args)

    return pred_p, h_new_p, c_new_p


def decoder_forward(x, hidden, cell, kparams):
    """Logical-shape wrapper: x (B, output_dim); hidden/cell (L, B, H)."""
    n_layers, B, H = hidden.shape
    out_dim = x.shape[-1]
    Bp = _round_up(B, 16)                 # bf16 MXU-LHS sublane packing
    Din0p = _round_up(out_dim, 8)
    Op = kparams["b_fc"].shape[-1]
    del Op  # pred padding handled by the padded core

    x_pad = jnp.zeros((Bp, Din0p), jnp.float32).at[:B, :out_dim].set(x)
    h_pad = jnp.zeros((n_layers, Bp, H), jnp.float32).at[:, :B, :].set(hidden)
    c_pad = jnp.zeros((n_layers, Bp, H), jnp.float32).at[:, :B, :].set(cell)

    pred_p, h_p, c_p = decoder_forward_padded(x_pad, h_pad, c_pad, kparams)
    return pred_p[:B, :out_dim], h_p[:, :B, :], c_p[:, :B, :]


def make_params(key, output_dim, hid_dim, n_layers):
    """PyTorch-style uniform(-1/sqrt(H), 1/sqrt(H)) init, logical layout."""
    bound = 1.0 / float(hid_dim) ** 0.5
    params = {}
    keys = jax.random.split(key, 4 * n_layers + 2)
    ki = 0
    for l in range(n_layers):
        d_in = output_dim if l == 0 else hid_dim
        params[f"w_ih_{l}"] = jax.random.uniform(
            keys[ki], (4 * hid_dim, d_in), jnp.float32, -bound, bound); ki += 1
        params[f"w_hh_{l}"] = jax.random.uniform(
            keys[ki], (4 * hid_dim, hid_dim), jnp.float32, -bound, bound); ki += 1
        params[f"b_ih_{l}"] = jax.random.uniform(
            keys[ki], (4 * hid_dim,), jnp.float32, -bound, bound); ki += 1
        params[f"b_hh_{l}"] = jax.random.uniform(
            keys[ki], (4 * hid_dim,), jnp.float32, -bound, bound); ki += 1
    params["w_fc"] = jax.random.uniform(
        keys[-2], (output_dim, hid_dim), jnp.float32, -bound, bound)
    params["b_fc"] = jax.random.uniform(
        keys[-1], (output_dim,), jnp.float32, -bound, bound)
    return params


def pack_params(params, output_dim, hid_dim, n_layers):
    """Quantize (int8, per-output-channel) and pack kernel operands.

    Returns (kparams, qlog): kparams = padded / transposed kernel arrays,
    qlog = logical-orientation quantized weights for the numerics-matched
    reference.
    """
    H = hid_dim
    Gp = _round_up(4 * H, 128)            # gates packed contiguously (i,f,g,o)
    Op = _round_up(output_dim, 128)
    Din0p = _round_up(output_dim, 8)

    def quant_rows(ws):
        # per-output-channel (row) int8 quantization over concat(ws, axis=1)
        cat = jnp.concatenate(ws, axis=1)
        amax = jnp.max(jnp.abs(cat), axis=1)
        scale = jnp.where(amax > 0, amax / 127.0, 1.0)
        qs = [jnp.clip(jnp.round(w / scale[:, None]), -127, 127).astype(jnp.int8)
              for w in ws]
        return qs, scale

    w_x0 = jnp.zeros((Din0p, Gp), jnp.int8)
    w_in = jnp.zeros((max(n_layers - 1, 1), H, Gp), jnp.int8)
    w_hh = jnp.zeros((n_layers, H, Gp), jnp.int8)
    s = jnp.ones((n_layers, 1, Gp), jnp.float32)
    b = jnp.zeros((n_layers, 1, Gp), jnp.float32)

    qlog = {}
    for l in range(n_layers):
        w_ih_l = params[f"w_ih_{l}"]                 # (4H, d_in), gate order i,f,g,o
        w_hh_l = params[f"w_hh_{l}"]                 # (4H, H)
        (q_ih, q_hh), scale = quant_rows([w_ih_l, w_hh_l])
        bias = params[f"b_ih_{l}"] + params[f"b_hh_{l}"]
        if l == 0:
            w_x0 = w_x0.at[:output_dim, :4 * H].set(q_ih.T)
        else:
            w_in = w_in.at[l - 1, :, :4 * H].set(q_ih.T)
        w_hh = w_hh.at[l, :, :4 * H].set(q_hh.T)
        s = s.at[l, 0, :4 * H].set(scale)
        b = b.at[l, 0, :4 * H].set(bias)
        qlog[f"q_ih_{l}"], qlog[f"q_hh_{l}"] = q_ih, q_hh
        qlog[f"s_{l}"], qlog[f"b_{l}"] = scale, bias

    (q_fc,), s_fc_v = quant_rows([params["w_fc"]])   # (output_dim, H)
    w_fc = jnp.zeros((H, Op), jnp.int8).at[:, :output_dim].set(q_fc.T)
    s_fc = jnp.ones((1, Op), jnp.float32).at[0, :output_dim].set(s_fc_v)
    b_fc = jnp.zeros((1, Op), jnp.float32).at[0, :output_dim].set(params["b_fc"])
    qlog["q_fc"], qlog["s_fc"], qlog["b_fc"] = q_fc, s_fc_v, params["b_fc"]

    kparams = dict(w_x0=w_x0, w_in=w_in, w_hh=w_hh, s=s, b=b,
                   w_fc=w_fc, s_fc=s_fc, b_fc=b_fc)
    return kparams, qlog


def reference_forward(x, hidden, cell, qlog, n_layers, hid_dim):
    """Pure-JAX reference of Decoder.forward (eval mode) with the same
    weight-only int8 quantization / bf16 matmul inputs / f32 accumulation."""
    H = hid_dim
    f32 = jnp.float32
    bf = lambda a: a.astype(jnp.bfloat16)
    qbf = lambda q: q.astype(f32).astype(jnp.bfloat16)

    h_out, c_out = [], []
    layer_in = x
    for l in range(n_layers):
        d1 = jnp.dot(bf(layer_in), qbf(qlog[f"q_ih_{l}"].T),
                     preferred_element_type=f32)
        d2 = jnp.dot(bf(hidden[l]), qbf(qlog[f"q_hh_{l}"].T),
                     preferred_element_type=f32)
        gates = (d1 + d2) * qlog[f"s_{l}"] + qlog[f"b_{l}"]
        i_g = jax.nn.sigmoid(gates[:, 0 * H:1 * H])
        f_g = jax.nn.sigmoid(gates[:, 1 * H:2 * H])
        g_g = jnp.tanh(gates[:, 2 * H:3 * H])
        o_g = jax.nn.sigmoid(gates[:, 3 * H:4 * H])
        c_new = f_g * cell[l] + i_g * g_g
        h_new = o_g * jnp.tanh(c_new)
        h_out.append(h_new)
        c_out.append(c_new)
        layer_in = h_new
    pred = (jnp.dot(bf(layer_in), qbf(qlog["q_fc"].T), preferred_element_type=f32)
            * qlog["s_fc"] + qlog["b_fc"])
    return pred, jnp.stack(h_out), jnp.stack(c_out)


if __name__ == "__main__":
    # Small shapes consistent with the module.
    output_dim, hid_dim, n_layers = 16, 32, 2
    batch = 8

    key = jax.random.PRNGKey(0)
    k_x, k_h, k_c, k_p = jax.random.split(key, 4)

    x = jax.random.normal(k_x, (batch, output_dim), jnp.float32)  # 2-D -> unsqueeze path
    hidden = jax.random.normal(k_h, (n_layers, batch, hid_dim), jnp.float32)
    cell = jax.random.normal(k_c, (n_layers, batch, hid_dim), jnp.float32)

    logical = make_params(k_p, output_dim, hid_dim, n_layers)
    kparams, qlog = pack_params(logical, output_dim, hid_dim, n_layers)

    pred, h_new, c_new = decoder_forward(x, hidden, cell, kparams)
    jax.block_until_ready((pred, h_new, c_new))

    # Correctness check against a pure-JAX reference with matched numerics
    # (identical int8-quantized weights, bf16 matmul inputs, f32 accumulation).
    pred_r, h_r, c_r = reference_forward(x, hidden, cell, qlog, n_layers, hid_dim)
    assert jnp.allclose(pred, pred_r, atol=2e-2, rtol=2e-2), "prediction mismatch"
    assert jnp.allclose(h_new, h_r, atol=2e-2, rtol=2e-2), "hidden mismatch"
    assert jnp.allclose(c_new, c_r, atol=2e-2, rtol=2e-2), "cell mismatch"

    print("KERNEL_OK")
</pallas_src>

<mosaic_0001>
module attributes {stable_mosaic.version = 11 : i64} {
  func.func @_decoder_kernel(%arg0: i32, %arg1: memref<16x16xf32, #tpu.memory_space<vmem>>, %arg2: memref<2x16x32xf32, #tpu.memory_space<vmem>>, %arg3: memref<2x16x32xf32, #tpu.memory_space<vmem>>, %arg4: memref<16x128xi8, #tpu.memory_space<vmem>>, %arg5: memref<1x32x128xi8, #tpu.memory_space<vmem>>, %arg6: memref<2x32x128xi8, #tpu.memory_space<vmem>>, %arg7: memref<2x1x128xf32, #tpu.memory_space<vmem>>, %arg8: memref<2x1x128xf32, #tpu.memory_space<vmem>>, %arg9: memref<32x128xi8, #tpu.memory_space<vmem>>, %arg10: memref<1x128xf32, #tpu.memory_space<vmem>>, %arg11: memref<1x128xf32, #tpu.memory_space<vmem>>, %arg12: memref<16x128xf32, #tpu.memory_space<vmem>>, %arg13: memref<2x16x32xf32, #tpu.memory_space<vmem>>, %arg14: memref<2x16x32xf32, #tpu.memory_space<vmem>>) attributes {dimension_semantics = [#tpu.dimension_semantics<arbitrary>], iteration_bounds = array<i64: 1>, scalar_prefetch = 0 : i64, scratch_operands = 0 : i64, tpu.core_type = #tpu.core_type<tc>, window_params = [{pipeline_mode = #tpu.pipeline_mode<synchronous>, transform_indices = @transform_0, window_bounds = array<i64: 16, 16>}, {pipeline_mode = #tpu.pipeline_mode<synchronous>, transform_indices = @transform_1, window_bounds = array<i64: 2, 16, 32>}, {pipeline_mode = #tpu.pipeline_mode<synchronous>, transform_indices = @transform_2, window_bounds = array<i64: 2, 16, 32>}, {pipeline_mode = #tpu.pipeline_mode<synchronous>, transform_indices = @transform_3, window_bounds = array<i64: 16, 128>}, {pipeline_mode = #tpu.pipeline_mode<synchronous>, transform_indices = @transform_4, window_bounds = array<i64: 1, 32, 128>}, {pipeline_mode = #tpu.pipeline_mode<synchronous>, transform_indices = @transform_5, window_bounds = array<i64: 2, 32, 128>}, {pipeline_mode = #tpu.pipeline_mode<synchronous>, transform_indices = @transform_6, window_bounds = array<i64: 2, 1, 128>}, {pipeline_mode = #tpu.pipeline_mode<synchronous>, transform_indices = @transform_7, window_bounds = array<i64: 2, 1, 128>}, {pipeline_mode = #tpu.pipeline_mode<synchronous>, transform_indices = @transform_8, window_bounds = array<i64: 32, 128>}, {pipeline_mode = #tpu.pipeline_mode<synchronous>, transform_indices = @transform_9, window_bounds = array<i64: 1, 128>}, {pipeline_mode = #tpu.pipeline_mode<synchronous>, transform_indices = @transform_10, window_bounds = array<i64: 1, 128>}, {pipeline_mode = #tpu.pipeline_mode<synchronous>, transform_indices = @transform_11, window_bounds = array<i64: 16, 128>}, {pipeline_mode = #tpu.pipeline_mode<synchronous>, transform_indices = @transform_12, window_bounds = array<i64: 2, 16, 32>}, {pipeline_mode = #tpu.pipeline_mode<synchronous>, transform_indices = @transform_13, window_bounds = array<i64: 2, 16, 32>}]} {
    %c0 = arith.constant 0 : index
    %c0_0 = arith.constant 0 : index
    %0 = vector.load %arg1[%c0, %c0_0] : memref<16x16xf32, #tpu.memory_space<vmem>>, vector<16x16xf32>
    %1 = arith.truncf %0 : vector<16x16xf32> to vector<16x16xbf16>
    %c0_1 = arith.constant 0 : index
    %c0_2 = arith.constant 0 : index
    %2 = vector.load %arg4[%c0_1, %c0_2] : memref<16x128xi8, #tpu.memory_space<vmem>>, vector<16x128xi8>
    %c0_3 = arith.constant 0 : index
    %c0_4 = arith.constant 0 : index
    %c0_5 = arith.constant 0 : index
    %3 = vector.load %arg2[%c0_3, %c0_4, %c0_5] : memref<2x16x32xf32, #tpu.memory_space<vmem>>, vector<1x16x32xf32>
    %4 = vector.shape_cast %3 : vector<1x16x32xf32> to vector<16x32xf32>
    %c0_6 = arith.constant 0 : index
    %c0_7 = arith.constant 0 : index
    %c0_8 = arith.constant 0 : index
    %5 = vector.load %arg3[%c0_6, %c0_7, %c0_8] : memref<2x16x32xf32, #tpu.memory_space<vmem>>, vector<1x16x32xf32>
    %6 = vector.shape_cast %5 : vector<1x16x32xf32> to vector<16x32xf32>
    %7 = arith.sitofp %2 : vector<16x128xi8> to vector<16x128xf32>
    %8 = arith.truncf %7 : vector<16x128xf32> to vector<16x128xbf16>
    %cst = arith.constant dense<0.000000e+00> : vector<16x128xf32>
    %9 = tpu.matmul %1, %8, %cst {dimension_numbers = #tpu.dot_dimension_numbers<[1], [0], [0], [1], [0, 0, 1, 1], [], []>} : vector<16x16xbf16>, vector<16x128xbf16>, vector<16x128xf32> -> vector<16x128xf32>
    %10 = arith.truncf %4 : vector<16x32xf32> to vector<16x32xbf16>
    %c0_9 = arith.constant 0 : index
    %c0_10 = arith.constant 0 : index
    %c0_11 = arith.constant 0 : index
    %11 = vector.load %arg6[%c0_9, %c0_10, %c0_11] : memref<2x32x128xi8, #tpu.memory_space<vmem>>, vector<1x32x128xi8>
    %12 = vector.shape_cast %11 : vector<1x32x128xi8> to vector<32x128xi8>
    %13 = arith.sitofp %12 : vector<32x128xi8> to vector<32x128xf32>
    %14 = arith.truncf %13 : vector<32x128xf32> to vector<32x128xbf16>
    %cst_12 = arith.constant dense<0.000000e+00> : vector<16x128xf32>
    %15 = tpu.matmul %10, %14, %cst_12 {dimension_numbers = #tpu.dot_dimension_numbers<[1], [0], [0], [1], [0, 0, 1, 1], [], []>} : vector<16x32xbf16>, vector<32x128xbf16>, vector<16x128xf32> -> vector<16x128xf32>
    %16 = arith.addf %9, %15 : vector<16x128xf32>
    %c0_13 = arith.constant 0 : index
    %c0_14 = arith.constant 0 : index
    %c0_15 = arith.constant 0 : index
    %17 = vector.load %arg7[%c0_13, %c0_14, %c0_15] : memref<2x1x128xf32, #tpu.memory_space<vmem>>, vector<1x1x128xf32>
    %18 = vector.shape_cast %17 : vector<1x1x128xf32> to vector<1x128xf32>
    %19 = vector.broadcast %18 : vector<1x128xf32> to vector<16x128xf32>
    %20 = arith.mulf %16, %19 : vector<16x128xf32>
    %c0_16 = arith.constant 0 : index
    %c0_17 = arith.constant 0 : index
    %c0_18 = arith.constant 0 : index
    %21 = vector.load %arg8[%c0_16, %c0_17, %c0_18] : memref<2x1x128xf32, #tpu.memory_space<vmem>>, vector<1x1x128xf32>
    %22 = vector.shape_cast %21 : vector<1x1x128xf32> to vector<1x128xf32>
    %23 = vector.broadcast %22 : vector<1x128xf32> to vector<16x128xf32>
    %24 = arith.addf %20, %23 : vector<16x128xf32>
    %25 = vector.extract_strided_slice %24 {offsets = [0, 0], sizes = [16, 32], strides = [1, 1]} : vector<16x128xf32> to vector<16x32xf32>
    %26 = arith.negf %25 : vector<16x32xf32>
    %27 = math.exp %26 : vector<16x32xf32>
    %cst_19 = arith.constant 1.000000e+00 : f32
    %28 = vector.broadcast %cst_19 : f32 to vector<16x32xf32>
    %29 = arith.addf %28, %27 : vector<16x32xf32>
    %30 = arith.divf %28, %29 : vector<16x32xf32>
    %31 = vector.extract_strided_slice %24 {offsets = [0, 32], sizes = [16, 32], strides = [1, 1]} : vector<16x128xf32> to vector<16x32xf32>
    %32 = arith.negf %31 : vector<16x32xf32>
    %33 = math.exp %32 : vector<16x32xf32>
    %cst_20 = arith.constant 1.000000e+00 : f32
    %34 = vector.broadcast %cst_20 : f32 to vector<16x32xf32>
    %35 = arith.addf %34, %33 : vector<16x32xf32>
    %36 = arith.divf %34, %35 : vector<16x32xf32>
    %37 = vector.extract_strided_slice %24 {offsets = [0, 64], sizes = [16, 32], strides = [1, 1]} : vector<16x128xf32> to vector<16x32xf32>
    %38 = math.tanh %37 : vector<16x32xf32>
    %39 = vector.extract_strided_slice %24 {offsets = [0, 96], sizes = [16, 32], strides = [1, 1]} : vector<16x128xf32> to vector<16x32xf32>
    %40 = arith.negf %39 : vector<16x32xf32>
    %41 = math.exp %40 : vector<16x32xf32>
    %cst_21 = arith.constant 1.000000e+00 : f32
    %42 = vector.broadcast %cst_21 : f32 to vector<16x32xf32>
    %43 = arith.addf %42, %41 : vector<16x32xf32>
    %44 = arith.divf %42, %43 : vector<16x32xf32>
    %45 = arith.mulf %36, %6 : vector<16x32xf32>
    %46 = arith.mulf %30, %38 : vector<16x32xf32>
    %47 = arith.addf %45, %46 : vector<16x32xf32>
    %48 = math.tanh %47 : vector<16x32xf32>
    %49 = arith.mulf %44, %48 : vector<16x32xf32>
    %c0_22 = arith.constant 0 : index
    %c0_23 = arith.constant 0 : index
    %c0_24 = arith.constant 0 : index
    %50 = vector.load %arg13[%c0_22, %c0_23, %c0_24] : memref<2x16x32xf32, #tpu.memory_space<vmem>>, vector<1x16x32xf32>
    %51 = vector.shape_cast %50 : vector<1x16x32xf32> to vector<16x32xf32>
    %52 = vector.shape_cast %49 : vector<16x32xf32> to vector<1x16x32xf32>
    tpu.vector_store %arg13[%c0_22, %c0_23, %c0_24], %52 {strides = array<i32>} : memref<2x16x32xf32, #tpu.memory_space<vmem>>, vector<1x16x32xf32>,
    %c0_25 = arith.constant 0 : index
    %c0_26 = arith.constant 0 : index
    %c0_27 = arith.constant 0 : index
    %53 = vector.load %arg14[%c0_25, %c0_26, %c0_27] : memref<2x16x32xf32, #tpu.memory_space<vmem>>, vector<1x16x32xf32>
    %54 = vector.shape_cast %53 : vector<1x16x32xf32> to vector<16x32xf32>
    %55 = vector.shape_cast %47 : vector<16x32xf32> to vector<1x16x32xf32>
    tpu.vector_store %arg14[%c0_25, %c0_26, %c0_27], %55 {strides = array<i32>} : memref<2x16x32xf32, #tpu.memory_space<vmem>>, vector<1x16x32xf32>,
    %56 = arith.truncf %49 : vector<16x32xf32> to vector<16x32xbf16>
    %c0_28 = arith.constant 0 : index
    %c0_29 = arith.constant 0 : index
    %c0_30 = arith.constant 0 : index
    %57 = vector.load %arg5[%c0_28, %c0_29, %c0_30] : memref<1x32x128xi8, #tpu.memory_space<vmem>>, vector<1x32x128xi8>
    %58 = vector.shape_cast %57 : vector<1x32x128xi8> to vector<32x128xi8>
    %c1 = arith.constant 1 : index
    %c0_31 = arith.constant 0 : index
    %c0_32 = arith.constant 0 : index
    %59 = vector.load %arg2[%c1, %c0_31, %c0_32] : memref<2x16x32xf32, #tpu.memory_space<vmem>>, vector<1x16x32xf32>
    %60 = vector.shape_cast %59 : vector<1x16x32xf32> to vector<16x32xf32>
    %c1_33 = arith.constant 1 : index
    %c0_34 = arith.constant 0 : index
    %c0_35 = arith.constant 0 : index
    %61 = vector.load %arg3[%c1_33, %c0_34, %c0_35] : memref<2x16x32xf32, #tpu.memory_space<vmem>>, vector<1x16x32xf32>
    %62 = vector.shape_cast %61 : vector<1x16x32xf32> to vector<16x32xf32>
    %63 = arith.sitofp %58 : vector<32x128xi8> to vector<32x128xf32>
    %64 = arith.truncf %63 : vector<32x128xf32> to vector<32x128xbf16>
    %cst_36 = arith.constant dense<0.000000e+00> : vector<16x128xf32>
    %65 = tpu.matmul %56, %64, %cst_36 {dimension_numbers = #tpu.dot_dimension_numbers<[1], [0], [0], [1], [0, 0, 1, 1], [], []>} : vector<16x32xbf16>, vector<32x128xbf16>, vector<16x128xf32> -> vector<16x128xf32>
    %66 = arith.truncf %60 : vector<16x32xf32> to vector<16x32xbf16>
    %c1_37 = arith.constant 1 : index
    %c0_38 = arith.constant 0 : index
    %c0_39 = arith.constant 0 : index
    %67 = vector.load %arg6[%c1_37, %c0_38, %c0_39] : memref<2x32x128xi8, #tpu.memory_space<vmem>>, vector<1x32x128xi8>
    %68 = vector.shape_cast %67 : vector<1x32x128xi8> to vector<32x128xi8>
    %69 = arith.sitofp %68 : vector<32x128xi8> to vector<32x128xf32>
    %70 = arith.truncf %69 : vector<32x128xf32> to vector<32x128xbf16>
    %cst_40 = arith.constant dense<0.000000e+00> : vector<16x128xf32>
    %71 = tpu.matmul %66, %70, %cst_40 {dimension_numbers = #tpu.dot_dimension_numbers<[1], [0], [0], [1], [0, 0, 1, 1], [], []>} : vector<16x32xbf16>, vector<32x128xbf16>, vector<16x128xf32> -> vector<16x128xf32>
    %72 = arith.addf %65, %71 : vector<16x128xf32>
    %c1_41 = arith.constant 1 : index
    %c0_42 = arith.constant 0 : index
    %c0_43 = arith.constant 0 : index
    %73 = vector.load %arg7[%c1_41, %c0_42, %c0_43] : memref<2x1x128xf32, #tpu.memory_space<vmem>>, vector<1x1x128xf32>
    %74 = vector.shape_cast %73 : vector<1x1x128xf32> to vector<1x128xf32>
    %75 = vector.broadcast %74 : vector<1x128xf32> to vector<16x128xf32>
    %76 = arith.mulf %72, %75 : vector<16x128xf32>
    %c1_44 = arith.constant 1 : index
    %c0_45 = arith.constant 0 : index
    %c0_46 = arith.constant 0 : index
    %77 = vector.load %arg8[%c1_44, %c0_45, %c0_46] : memref<2x1x128xf32, #tpu.memory_space<vmem>>, vector<1x1x128xf32>
    %78 = vector.shape_cast %77 : vector<1x1x128xf32> to vector<1x128xf32>
    %79 = vector.broadcast %78 : vector<1x128xf32> to vector<16x128xf32>
    %80 = arith.addf %76, %79 : vector<16x128xf32>
    %81 = vector.extract_strided_slice %80 {offsets = [0, 0], sizes = [16, 32], strides = [1, 1]} : vector<16x128xf32> to vector<16x32xf32>
    %82 = arith.negf %81 : vector<16x32xf32>
    %83 = math.exp %82 : vector<16x32xf32>
    %cst_47 = arith.constant 1.000000e+00 : f32
    %84 = vector.broadcast %cst_47 : f32 to vector<16x32xf32>
    %85 = arith.addf %84, %83 : vector<16x32xf32>
    %86 = arith.divf %84, %85 : vector<16x32xf32>
    %87 = vector.extract_strided_slice %80 {offsets = [0, 32], sizes = [16, 32], strides = [1, 1]} : vector<16x128xf32> to vector<16x32xf32>
    %88 = arith.negf %87 : vector<16x32xf32>
    %89 = math.exp %88 : vector<16x32xf32>
    %cst_48 = arith.constant 1.000000e+00 : f32
    %90 = vector.broadcast %cst_48 : f32 to vector<16x32xf32>
    %91 = arith.addf %90, %89 : vector<16x32xf32>
    %92 = arith.divf %90, %91 : vector<16x32xf32>
    %93 = vector.extract_strided_slice %80 {offsets = [0, 64], sizes = [16, 32], strides = [1, 1]} : vector<16x128xf32> to vector<16x32xf32>
    %94 = math.tanh %93 : vector<16x32xf32>
    %95 = vector.extract_strided_slice %80 {offsets = [0, 96], sizes = [16, 32], strides = [1, 1]} : vector<16x128xf32> to vector<16x32xf32>
    %96 = arith.negf %95 : vector<16x32xf32>
    %97 = math.exp %96 : vector<16x32xf32>
    %cst_49 = arith.constant 1.000000e+00 : f32
    %98 = vector.broadcast %cst_49 : f32 to vector<16x32xf32>
    %99 = arith.addf %98, %97 : vector<16x32xf32>
    %100 = arith.divf %98, %99 : vector<16x32xf32>
    %101 = arith.mulf %92, %62 : vector<16x32xf32>
    %102 = arith.mulf %86, %94 : vector<16x32xf32>
    %103 = arith.addf %101, %102 : vector<16x32xf32>
    %104 = math.tanh %103 : vector<16x32xf32>
    %105 = arith.mulf %100, %104 : vector<16x32xf32>
    %c1_50 = arith.constant 1 : index
    %c0_51 = arith.constant 0 : index
    %c0_52 = arith.constant 0 : index
    %106 = vector.load %arg13[%c1_50, %c0_51, %c0_52] : memref<2x16x32xf32, #tpu.memory_space<vmem>>, vector<1x16x32xf32>
    %107 = vector.shape_cast %106 : vector<1x16x32xf32> to vector<16x32xf32>
    %108 = vector.shape_cast %105 : vector<16x32xf32> to vector<1x16x32xf32>
    tpu.vector_store %arg13[%c1_50, %c0_51, %c0_52], %108 {strides = array<i32>} : memref<2x16x32xf32, #tpu.memory_space<vmem>>, vector<1x16x32xf32>,
    %c1_53 = arith.constant 1 : index
    %c0_54 = arith.constant 0 : index
    %c0_55 = arith.constant 0 : index
    %109 = vector.load %arg14[%c1_53, %c0_54, %c0_55] : memref<2x16x32xf32, #tpu.memory_space<vmem>>, vector<1x16x32xf32>
    %110 = vector.shape_cast %109 : vector<1x16x32xf32> to vector<16x32xf32>
    %111 = vector.shape_cast %103 : vector<16x32xf32> to vector<1x16x32xf32>
    tpu.vector_store %arg14[%c1_53, %c0_54, %c0_55], %111 {strides = array<i32>} : memref<2x16x32xf32, #tpu.memory_space<vmem>>, vector<1x16x32xf32>,
    %112 = arith.truncf %105 : vector<16x32xf32> to vector<16x32xbf16>
    %c0_56 = arith.constant 0 : index
    %c0_57 = arith.constant 0 : index
    %113 = vector.load %arg9[%c0_56, %c0_57] : memref<32x128xi8, #tpu.memory_space<vmem>>, vector<32x128xi8>
    %114 = arith.sitofp %113 : vector<32x128xi8> to vector<32x128xf32>
    %115 = arith.truncf %114 : vector<32x128xf32> to vector<32x128xbf16>
    %cst_58 = arith.constant dense<0.000000e+00> : vector<16x128xf32>
    %116 = tpu.matmul %112, %115, %cst_58 {dimension_numbers = #tpu.dot_dimension_numbers<[1], [0], [0], [1], [0, 0, 1, 1], [], []>} : vector<16x32xbf16>, vector<32x128xbf16>, vector<16x128xf32> -> vector<16x128xf32>
    %c0_59 = arith.constant 0 : index
    %c0_60 = arith.constant 0 : index
    %117 = vector.load %arg10[%c0_59, %c0_60] : memref<1x128xf32, #tpu.memory_space<vmem>>, vector<1x128xf32>
    %118 = vector.broadcast %117 : vector<1x128xf32> to vector<16x128xf32>
    %119 = arith.mulf %116, %118 : vector<16x128xf32>
    %c0_61 = arith.constant 0 : index
    %c0_62 = arith.constant 0 : index
    %120 = vector.load %arg11[%c0_61, %c0_62] : memref<1x128xf32, #tpu.memory_space<vmem>>, vector<1x128xf32>
    %121 = vector.broadcast %120 : vector<1x128xf32> to vector<16x128xf32>
    %122 = arith.addf %119, %121 : vector<16x128xf32>
    %c0_63 = arith.constant 0 : index
    %c0_64 = arith.constant 0 : index
    %123 = vector.load %arg12[%c0_63, %c0_64] : memref<16x128xf32, #tpu.memory_space<vmem>>, vector<16x128xf32>
    tpu.vector_store %arg12[%c0_63, %c0_64], %122 {strides = array<i32>} : memref<16x128xf32, #tpu.memory_space<vmem>>, vector<16x128xf32>,
    return
  }
  func.func @transform_0(%arg0: i32) -> (i32, i32) {
    %c0_i32 = arith.constant 0 : i32
    %c0_i32_0 = arith.constant 0 : i32
    %c0_i32_1 = arith.constant 0 : i32
    return %c0_i32, %c0_i32_0 : i32, i32
  }
  func.func @transform_1(%arg0: i32) -> (i32, i32, i32) {
    %c0_i32 = arith.constant 0 : i32
    %c0_i32_0 = arith.constant 0 : i32
    %c0_i32_1 = arith.constant 0 : i32
    %c0_i32_2 = arith.constant 0 : i32
    return %c0_i32, %c0_i32_0, %c0_i32_1 : i32, i32, i32
  }
  func.func @transform_2(%arg0: i32) -> (i32, i32, i32) {
    %c0_i32 = arith.constant 0 : i32
    %c0_i32_0 = arith.constant 0 : i32
    %c0_i32_1 = arith.constant 0 : i32
    %c0_i32_2 = arith.constant 0 : i32
    return %c0_i32, %c0_i32_0, %c0_i32_1 : i32, i32, i32
  }
  func.func @transform_3(%arg0: i32) -> (i32, i32) {
    %c0_i32 = arith.constant 0 : i32
    %c0_i32_0 = arith.constant 0 : i32
    %c0_i32_1 = arith.constant 0 : i32
    return %c0_i32, %c0_i32_0 : i32, i32
  }
  func.func @transform_4(%arg0: i32) -> (i32, i32, i32) {
    %c0_i32 = arith.constant 0 : i32
    %c0_i32_0 = arith.constant 0 : i32
    %c0_i32_1 = arith.constant 0 : i32
    %c0_i32_2 = arith.constant 0 : i32
    return %c0_i32, %c0_i32_0, %c0_i32_1 : i32, i32, i32
  }
  func.func @transform_5(%arg0: i32) -> (i32, i32, i32) {
    %c0_i32 = arith.constant 0 : i32
    %c0_i32_0 = arith.constant 0 : i32
    %c0_i32_1 = arith.constant 0 : i32
    %c0_i32_2 = arith.constant 0 : i32
    return %c0_i32, %c0_i32_0, %c0_i32_1 : i32, i32, i32
  }
  func.func @transform_6(%arg0: i32) -> (i32, i32, i32) {
    %c0_i32 = arith.constant 0 : i32
    %c0_i32_0 = arith.constant 0 : i32
    %c0_i32_1 = arith.constant 0 : i32
    %c0_i32_2 = arith.constant 0 : i32
    return %c0_i32, %c0_i32_0, %c0_i32_1 : i32, i32, i32
  }
  func.func @transform_7(%arg0: i32) -> (i32, i32, i32) {
    %c0_i32 = arith.constant 0 : i32
    %c0_i32_0 = arith.constant 0 : i32
    %c0_i32_1 = arith.constant 0 : i32
    %c0_i32_2 = arith.constant 0 : i32
    return %c0_i32, %c0_i32_0, %c0_i32_1 : i32, i32, i32
  }
  func.func @transform_8(%arg0: i32) -> (i32, i32) {
    %c0_i32 = arith.constant 0 : i32
    %c0_i32_0 = arith.constant 0 : i32
    %c0_i32_1 = arith.constant 0 : i32
    return %c0_i32, %c0_i32_0 : i32, i32
  }
  func.func @transform_9(%arg0: i32) -> (i32, i32) {
    %c0_i32 = arith.constant 0 : i32
    %c0_i32_0 = arith.constant 0 : i32
    %c0_i32_1 = arith.constant 0 : i32
    return %c0_i32, %c0_i32_0 : i32, i32
  }
  func.func @transform_10(%arg0: i32) -> (i32, i32) {
    %c0_i32 = arith.constant 0 : i32
    %c0_i32_0 = arith.constant 0 : i32
    %c0_i32_1 = arith.constant 0 : i32
    return %c0_i32, %c0_i32_0 : i32, i32
  }
  func.func @transform_11(%arg0: i32) -> (i32, i32) {
    %c0_i32 = arith.constant 0 : i32
    %c0_i32_0 = arith.constant 0 : i32
    %c0_i32_1 = arith.constant 0 : i32
    return %c0_i32, %c0_i32_0 : i32, i32
  }
  func.func @transform_12(%arg0: i32) -> (i32, i32, i32) {
    %c0_i32 = arith.constant 0 : i32
    %c0_i32_0 = arith.constant 0 : i32
    %c0_i32_1 = arith.constant 0 : i32
    %c0_i32_2 = arith.constant 0 : i32
    return %c0_i32, %c0_i32_0, %c0_i32_1 : i32, i32, i32
  }
  func.func @transform_13(%arg0: i32) -> (i32, i32, i32) {
    %c0_i32 = arith.constant 0 : i32
    %c0_i32_0 = arith.constant 0 : i32
    %c0_i32_1 = arith.constant 0 : i32
    %c0_i32_2 = arith.constant 0 : i32
    return %c0_i32, %c0_i32_0, %c0_i32_1 : i32, i32, i32
  }
}

</mosaic_0001>

<llo_original>
// kernel: decoder_forward_padded.1
$region0: #{decoder_forward_padded.1}
  #allocation0 [shape = 'u32[]', space=smem, size = 0x4, offset = 0x4, fixed_abs, tag = 'smem constant byte address 0x4 - core index']
  #allocation1 [shape = 'u32[72,128]{1,0:T(1,128)}', space=vmem, size = 0x9000, scoped, tag = 'internal scratch']
  %s0 = inlined_call_operand.vmem [shape: f32[16,16], index: 0, kind: input, shape index: {}]
  %s1 = inlined_call_operand.hbm [shape: f32[2,16,32], index: 1, kind: input, shape index: {}, may-alias: {1,12}]
  %s2 = inlined_call_operand.hbm [shape: f32[2,16,32], index: 2, kind: input, shape index: {}, may-alias: {2,13}]
  %s3 = inlined_call_operand.vmem [shape: s8[16,128], index: 3, kind: input, shape index: {}]
  %s4 = inlined_call_operand.vmem [shape: s8[1,32,128], index: 4, kind: input, shape index: {}]
  %s5 = inlined_call_operand.vmem [shape: s8[2,32,128], index: 5, kind: input, shape index: {}]
  %s6 = inlined_call_operand.vmem [shape: f32[2,1,128], index: 6, kind: input, shape index: {}]
  %s7 = inlined_call_operand.vmem [shape: f32[2,1,128], index: 7, kind: input, shape index: {}]
  %s8 = inlined_call_operand.vmem [shape: s8[32,128], index: 8, kind: input, shape index: {}]
  %s9 = inlined_call_operand.vmem [shape: f32[1,128], index: 9, kind: input, shape index: {}]
  %s10 = inlined_call_operand.vmem [shape: f32[1,128], index: 10, kind: input, shape index: {}]
  %s11 = inlined_call_operand.hbm [shape: f32[16,128], index: 11, kind: output, shape index: {0}]
  %s12 = inlined_call_operand.hbm [shape: f32[2,16,32], index: 12, kind: output, shape index: {1}, may-alias: {1,12}]
  %s13 = inlined_call_operand.hbm [shape: f32[2,16,32], index: 13, kind: output, shape index: {2}, may-alias: {2,13}]
  %14 = xla_tuple %s11, %s12, %s13
  %s15 = sld [smem:[#allocation0]]
  $region78: #{decoder_forward_padded.1} parent=0
    _
  %s17 = ssub.s32 1, %s15
  %s18 = scalar_select 0, %s17, %s15
  $region1: #{decoder_forward_padded.1} parent=0
    #allocation2 [shape = 'u8[16384]{0}', space=vmem, size = 0x4000, scoped, tag = 'input window, operand 1, single buffered']
    #allocation3 [shape = 's32[1]{0}', space=sflag, size = 0x4, scoped, tag = 'scoped memory for decoder_forward_padded.1']
    #allocation4 [shape = 's32[1]{0}', space=sflag, size = 0x4, scoped, tag = 'scoped memory for decoder_forward_padded.1']
    #allocation5 [shape = 'u8[16384]{0}', space=vmem, size = 0x4000, scoped, tag = 'input window, operand 2, single buffered']
    #allocation6 [shape = 's32[1]{0}', space=sflag, size = 0x4, scoped, tag = 'scoped memory for decoder_forward_padded.1']
    #allocation7 [shape = 'u8[8192]{0}', space=vmem, size = 0x2000, scoped, tag = 'output window, operand 0, single buffered']
    #allocation8 [shape = 'u8[16384]{0}', space=vmem, size = 0x4000, scoped, tag = 'output window, operand 1, single buffered']
    #allocation9 [shape = 's32[1]{0}', space=sflag, size = 0x4, scoped, tag = 'scoped memory for decoder_forward_padded.1']
    #allocation10 [shape = 'u8[16384]{0}', space=vmem, size = 0x4000, scoped, tag = 'output window, operand 2, single buffered']
    %19 = vsyncpa [#allocation3], 0
    %20 = vsyncpa [#allocation6], 0
    %21 = vsyncpa [#allocation4], 0
    %22 = vsyncpa [#allocation9], 0
    // Predicated region
    $region2: #{decoder_forward_padded.1} parent=1 // pred_check
      _
    $region3: #{decoder_forward_padded.1} parent=1 // pred_check_branch
      %24 = sbr.rel (0) target = $region5
    $region4: #{decoder_forward_padded.1} parent=1 // pred_region
      _
    $region5: #{decoder_forward_padded.1} parent=1 // pred_fallthru
      _
    // Predicated region
    $region6: #{decoder_forward_padded.1} parent=1 // pred_check
      _
    $region7: #{decoder_forward_padded.1} parent=1 // pred_check_branch
      %26 = sbr.rel (0) target = $region9
    $region8: #{decoder_forward_padded.1} parent=1 // pred_region
      %28 = vsyncadd [#allocation3], 0
      %s29 = sshll.u32 %s1, 4
      %s30 = int_to_ptr.hbm [resolvable:$true] %s29
      %s31 = sshll.u32 [#allocation2], 4
      %s32 = int_to_ptr.vmem [resolvable:$true] %s31
      %37 = dma.hbm_to_vmem [thread:$0]  %s30, 512, %s32, [#allocation3], 128, 128, 8
    $region9: #{decoder_forward_padded.1} parent=1 // pred_fallthru
      _
    // Predicated region
    $region10: #{decoder_forward_padded.1} parent=1 // pred_check
      _
    $region11: #{decoder_forward_padded.1} parent=1 // pred_check_branch
      %39 = sbr.rel (0) target = $region13
    $region12: #{decoder_forward_padded.1} parent=1 // pred_region
      %41 = vsyncadd [#allocation6], 0
      %s42 = sshll.u32 %s2, 4
      %s43 = int_to_ptr.hbm [resolvable:$true] %s42
      %s44 = sshll.u32 [#allocation5], 4
      %s45 = int_to_ptr.vmem [resolvable:$true] %s44
      %50 = dma.hbm_to_vmem [thread:$0]  %s43, 512, %s45, [#allocation6], 128, 128, 8
    $region13: #{decoder_forward_padded.1} parent=1 // pred_fallthru
      _
    // Predicated region
    $region14: #{decoder_forward_padded.1} parent=1 // pred_check
      _
    $region15: #{decoder_forward_padded.1} parent=1 // pred_check_branch
      %52 = sbr.rel (0) target = $region17
    $region16: #{decoder_forward_padded.1} parent=1 // pred_region
      _
    $region17: #{decoder_forward_padded.1} parent=1 // pred_fallthru
      _
    // Predicated region
    $region18: #{decoder_forward_padded.1} parent=1 // pred_check
      _
    $region19: #{decoder_forward_padded.1} parent=1 // pred_check_branch
      %54 = sbr.rel (0) target = $region21
    $region20: #{decoder_forward_padded.1} parent=1 // pred_region
      _
    $region21: #{decoder_forward_padded.1} parent=1 // pred_fallthru
      _
    // Predicated region
    $region22: #{decoder_forward_padded.1} parent=1 // pred_check
      _
    $region23: #{decoder_forward_padded.1} parent=1 // pred_check_branch
      %56 = sbr.rel (0) target = $region25
    $region24: #{decoder_forward_padded.1} parent=1 // pred_region
      _
    $region25: #{decoder_forward_padded.1} parent=1 // pred_fallthru
      _
    // Predicated region
    $region26: #{decoder_forward_padded.1} parent=1 // pred_check
      _
    $region27: #{decoder_forward_padded.1} parent=1 // pred_check_branch
      %58 = sbr.rel (0) target = $region29
    $region28: #{decoder_forward_padded.1} parent=1 // pred_region
      _
    $region29: #{decoder_forward_padded.1} parent=1 // pred_fallthru
      _
    // Predicated region
    $region30: #{decoder_forward_padded.1} parent=1 // pred_check
      _
    $region31: #{decoder_forward_padded.1} parent=1 // pred_check_branch
      %60 = sbr.rel (0) target = $region33
    $region32: #{decoder_forward_padded.1} parent=1 // pred_region
      _
    $region33: #{decoder_forward_padded.1} parent=1 // pred_fallthru
      _
    // Predicated region
    $region34: #{decoder_forward_padded.1} parent=1 // pred_check
      _
    $region35: #{decoder_forward_padded.1} parent=1 // pred_check_branch
      %62 = sbr.rel (0) target = $region37
    $region36: #{decoder_forward_padded.1} parent=1 // pred_region
      _
    $region37: #{decoder_forward_padded.1} parent=1 // pred_fallthru
      _
    // Predicated region
    $region38: #{decoder_forward_padded.1} parent=1 // pred_check
      _
    $region39: #{decoder_forward_padded.1} parent=1 // pred_check_branch
      %64 = sbr.rel (0) target = $region41
    $region40: #{decoder_forward_padded.1} parent=1 // pred_region
      _
    $region41: #{decoder_forward_padded.1} parent=1 // pred_fallthru
      _
    // Predicated region
    $region42: #{decoder_forward_padded.1} parent=1 // pred_check
      _
    $region43: #{decoder_forward_padded.1} parent=1 // pred_check_branch
      %66 = sbr.rel (0) target = $region45
    $region44: #{decoder_forward_padded.1} parent=1 // pred_region
      _
    $region45: #{decoder_forward_padded.1} parent=1 // pred_fallthru
      _
    // Predicated region
    $region46: #{decoder_forward_padded.1} parent=1 // pred_check
      _
    $region47: #{decoder_forward_padded.1} parent=1 // pred_check_branch
      %68 = sbr.rel (0) target = $region49
    $region48: #{decoder_forward_padded.1} parent=1 // pred_region
      %70 = dma.done [#allocation3], 512
    $region49: #{decoder_forward_padded.1} parent=1 // pred_fallthru
      _
    // Predicated region
    $region50: #{decoder_forward_padded.1} parent=1 // pred_check
      _
    $region51: #{decoder_forward_padded.1} parent=1 // pred_check_branch
      %72 = sbr.rel (0) target = $region53
    $region52: #{decoder_forward_padded.1} parent=1 // pred_region
      %74 = dma.done [#allocation6], 512
    $region53: #{decoder_forward_padded.1} parent=1 // pred_fallthru
      _
    %v76 = vld [vmem:[%s0] sm:$0xff]
    %v77 = vld [vmem:[%s0 + $0x8] sm:$0xff]
    %v78 = vpack.c.bf16 %v77, %v76
    %v79 = vld [vmem:[%s3] sm:$0x3]
    %v80 = vld [vmem:[%s3 + $0x2] sm:$0x3]
    %v81 = vld [vmem:[#allocation2] sm:$0xff]
    %v82 = vld [vmem:[#allocation2 + $0x8] sm:$0xff]
    %v83 = vld [vmem:[#allocation5] sm:$0xff]
    %v84 = vld [vmem:[#allocation5 + $0x8] sm:$0xff]
    %v85 = vunpack.c.0.s8 %v79
    %v86 = vunpack.c.0.s8 %v80
    %v87 = vcvt.s32.f32 %v85
    %v88 = vcvt.s32.f32 %v86
    %v89 = vpack.c.bf16 %v88, %v87
    %v90 = vpack.c.bf16 %v82, %v81
    %v91 = vld [vmem:[%s5] sm:$0xff]
    %v92 = vunpack.c.0.s8 %v91
    %v93 = vunpack.c.1.s8 %v91
    %v94 = vunpack.c.2.s8 %v91
    %v95 = vunpack.c.3.s8 %v91
    %v96 = vcvt.s32.f32 %v92
    %v97 = vcvt.s32.f32 %v93
    %v98 = vcvt.s32.f32 %v94
    %v99 = vcvt.s32.f32 %v95
    %v100 = vpack.c.bf16 %v97, %v96
    %v101 = vpack.c.bf16 %v99, %v98
    %vm102 = vcmask 261120
    %v104 = vsel %vm102, %v90, 0
    %106 = vmatpush.bf16.msra.mxu0 0
    %107 = vmatpush.bf16.msra.mxu0 0
    %108 = vmatpush.bf16.msra.mxu0 0
    %109 = vmatpush.bf16.msra.mxu0 0
    %110 = vmatpush.bf16.msra.mxu0 0
    %111 = vmatpush.bf16.msra.mxu0 0
    %112 = vmatpush.bf16.msra.mxu0 %v101
    %113 = vmatpush.bf16.msra.mxu0 %v100
    %114 = vmatmul.bf16.gmra.mxu0 %v104
    %v115 = vpop.f32.mrf.mxu0
    %v116 = vadd.f32 0.0, %v115
    %v117 = vpop.f32.mrf.mxu0
    %v118 = vadd.f32 0.0, %v117
    %119 = vdwg.mxu0
    %vm120 = vcmask 130048
    %v122 = vsel %vm120, %v78, 0
    %124 = vmatpush.bf16.msra.mxu0 0
    %125 = vmatpush.bf16.msra.mxu0 0
    %126 = vmatpush.bf16.msra.mxu0 0
    %127 = vmatpush.bf16.msra.mxu0 0
    %128 = vmatpush.bf16.msra.mxu0 0
    %129 = vmatpush.bf16.msra.mxu0 0
    %130 = vmatpush.bf16.msra.mxu0 0
    %131 = vmatpush.bf16.msra.mxu0 %v89
    %132 = vmatmul.bf16.gmra.mxu0 %v122
    %v133 = vpop.f32.mrf.mxu0
    %v134 = vadd.f32 %v116, %v133
    %v135 = vpop.f32.mrf.mxu0
    %v136 = vadd.f32 %v118, %v135
    %137 = vdwg.mxu0
    %v138 = vld [vmem:[%s6] sm:$0x1]
    %v140 = vperm.slane %v138, 0
    %v142 = vmul.f32 %v134, %v140
    %v143 = vmul.f32 %v136, %v140
    %v144 = vld [vmem:[%s7] sm:$0x1]
    %v146 = vperm.slane %v144, 0
    %v148 = vadd.f32 %v142, %v146
    %v149 = vadd.f32 %v143, %v146
    %v150 = vxor.u32 %v148, 2147483648
    %v151 = vxor.u32 %v149, 2147483648
    %v152 = vmul.f32 %v150, 1.442695
    %v153 = vpow.pop %v152
    %v154 = vmul.f32 %v151, 1.442695
    %v155 = vpow.pop %v154
    %v156 = vadd.f32 %v153, 1.0
    %v157 = vadd.f32 %v155, 1.0
    %v158 = vrcp.pop %v156
    %v159 = vmul.f32 %v156, %v158
    %v160 = vsub.f32 1.0, %v159
    %v161 = vmul.f32 %v158, %v160
    %v162 = vadd.f32 %v158, %v161
    %vm163 = vweird.f32 %v156
    %vm164 = vweird.f32 %v158
    %vm165 = vmor %vm163, %vm164
    %v166 = vsel %vm165, %v158, %v162
    %v167 = vand.u32 2147483647, %v156
    %vm168 = vcmp.eq.f32.partialorder %v167, 8.507059e+37
    %v169 = vand.u32 %v156, 2147483648
    %v170 = vor.u32 1.1754944e-38, %v169
    %v171 = vsel %vm168, %v170, %v166
    %v172 = vmul.f32 1.0, %v171
    %v173 = vrcp.pop %v157
    %v174 = vmul.f32 %v157, %v173
    %v175 = vsub.f32 1.0, %v174
    %v176 = vmul.f32 %v173, %v175
    %v177 = vadd.f32 %v173, %v176
    %vm178 = vweird.f32 %v157
    %vm179 = vweird.f32 %v173
    %vm180 = vmor %vm178, %vm179
    %v181 = vsel %vm180, %v173, %v177
    %v182 = vand.u32 2147483647, %v157
    %vm183 = vcmp.eq.f32.partialorder %v182, 8.507059e+37
    %v184 = vand.u32 %v157, 2147483648
    %v185 = vor.u32 1.1754944e-38, %v184
    %v186 = vsel %vm183, %v185, %v181
    %v187 = vmul.f32 1.0, %v186
    %v188 = vtanh.pop %v148
    %v189 = vtanh.pop %v149
    %192 = vrot.lane.b32.xlu0 %v83, 32
    %v193 = vpop.permute.xlu0 %192
    %194 = vrot.lane.b32.xlu0 %v84, 32
    %v195 = vpop.permute.xlu0 %194
    %v198 = vmul.f32 %v172, %v193
    %v199 = vmul.f32 %v187, %v195
    %202 = vrot.lane.b32.xlu0 %v188, 64
    %v203 = vpop.permute.xlu0 %202
    %204 = vrot.lane.b32.xlu0 %v189, 64
    %v205 = vpop.permute.xlu0 %204
    %v208 = vmul.f32 %v172, %v203
    %v209 = vmul.f32 %v187, %v205
    %212 = vrot.lane.b32.xlu0 %v208, 32
    %v213 = vpop.permute.xlu0 %212
    %214 = vrot.lane.b32.xlu0 %v209, 32
    %v215 = vpop.permute.xlu0 %214
    %v218 = vadd.f32 %v198, %v213
    %v219 = vadd.f32 %v199, %v215
    %v220 = vtanh.pop %v218
    %v221 = vtanh.pop %v219
    %224 = vrot.lane.b32.xlu0 %v220, 64
    %v225 = vpop.permute.xlu0 %224
    %226 = vrot.lane.b32.xlu0 %v221, 64
    %v227 = vpop.permute.xlu0 %226
    %v230 = vmul.f32 %v172, %v225
    %v231 = vmul.f32 %v187, %v227
    %234 = vrot.lane.b32.xlu0 %v230, 32
    %v235 = vpop.permute.xlu0 %234
    %236 = vrot.lane.b32.xlu0 %v231, 32
    %v237 = vpop.permute.xlu0 %236
    %240 = vst.msk [vmem:[#allocation8] sm:$0xff] %vm102, %v235
    %241 = vst.msk [vmem:[#allocation8 + $0x8] sm:$0xff] %vm102, %v237
    %244 = vrot.lane.b32.xlu0 %v218, 96
    %v245 = vpop.permute.xlu0 %244
    %246 = vrot.lane.b32.xlu0 %v219, 96
    %v247 = vpop.permute.xlu0 %246
    %250 = vst.msk [vmem:[#allocation10] sm:$0xff] %vm102, %v245
    %251 = vst.msk [vmem:[#allocation10 + $0x8] sm:$0xff] %vm102, %v247
    %v252 = vpack.c.bf16 %v231, %v230
    %v253 = vld [vmem:[%s4] sm:$0xff]
    %s254 = scalar_lea.vmem [#allocation2], 16
    %v255 = vld [vmem:[%s254] sm:$0xff]
    %v256 = vld [vmem:[%s254 + $0x8] sm:$0xff]
    %s257 = scalar_lea.vmem [#allocation5], 16
    %v258 = vld [vmem:[%s257] sm:$0xff]
    %v259 = vld [vmem:[%s257 + $0x8] sm:$0xff]
    %v260 = vunpack.c.0.s8 %v253
    %v261 = vunpack.c.1.s8 %v253
    %v262 = vunpack.c.2.s8 %v253
    %v263 = vunpack.c.3.s8 %v253
    %v264 = vcvt.s32.f32 %v260
    %v265 = vcvt.s32.f32 %v261
    %v266 = vcvt.s32.f32 %v262
    %v267 = vcvt.s32.f32 %v263
    %v268 = vpack.c.bf16 %v265, %v264
    %v269 = vpack.c.bf16 %v267, %v266
    %v270 = vpack.c.bf16 %v256, %v255
    %s271 = scalar_lea.vmem %s5, 8
    %v272 = vld [vmem:[%s271] sm:$0xff]
    %v273 = vunpack.c.0.s8 %v272
    %v274 = vunpack.c.1.s8 %v272
    %v275 = vunpack.c.2.s8 %v272
    %v276 = vunpack.c.3.s8 %v272
    %v277 = vcvt.s32.f32 %v273
    %v278 = vcvt.s32.f32 %v274
    %v279 = vcvt.s32.f32 %v275
    %v280 = vcvt.s32.f32 %v276
    %v281 = vpack.c.bf16 %v278, %v277
    %v282 = vpack.c.bf16 %v280, %v279
    %v284 = vsel %vm102, %v270, 0
    %286 = vmatpush.bf16.msra.mxu0 0
    %287 = vmatpush.bf16.msra.mxu0 0
    %288 = vmatpush.bf16.msra.mxu0 0
    %289 = vmatpush.bf16.msra.mxu0 0
    %290 = vmatpush.bf16.msra.mxu0 0
    %291 = vmatpush.bf16.msra.mxu0 0
    %292 = vmatpush.bf16.msra.mxu0 %v282
    %293 = vmatpush.bf16.msra.mxu0 %v281
    %294 = vmatmul.bf16.gmra.mxu0 %v284
    %v295 = vpop.f32.mrf.mxu0
    %v296 = vadd.f32 0.0, %v295
    %v297 = vpop.f32.mrf.mxu0
    %v298 = vadd.f32 0.0, %v297
    %299 = vdwg.mxu0
    %301 = vrot.lane.b32.xlu0 %v252, 32
    %v302 = vpop.permute.xlu0 %301
    %v304 = vsel %vm102, %v302, 0
    %306 = vmatpush.bf16.msra.mxu0 0
    %307 = vmatpush.bf16.msra.mxu0 0
    %308 = vmatpush.bf16.msra.mxu0 0
    %309 = vmatpush.bf16.msra.mxu0 0
    %310 = vmatpush.bf16.msra.mxu0 0
    %311 = vmatpush.bf16.msra.mxu0 0
    %312 = vmatpush.bf16.msra.mxu0 %v269
    %313 = vmatpush.bf16.msra.mxu0 %v268
    %314 = vmatmul.bf16.gmra.mxu0 %v304
    %v315 = vpop.f32.mrf.mxu0
    %v316 = vadd.f32 %v296, %v315
    %v317 = vpop.f32.mrf.mxu0
    %v318 = vadd.f32 %v298, %v317
    %319 = vdwg.mxu0
    %s320 = scalar_lea.vmem %s6, 1
    %v321 = vld [vmem:[%s320] sm:$0x1]
    %v323 = vperm.slane %v321, 0
    %v325 = vmul.f32 %v316, %v323
    %v326 = vmul.f32 %v318, %v323
    %s327 = scalar_lea.vmem %s7, 1
    %v328 = vld [vmem:[%s327] sm:$0x1]
    %v330 = vperm.slane %v328, 0
    %v332 = vadd.f32 %v325, %v330
    %v333 = vadd.f32 %v326, %v330
    %v334 = vxor.u32 %v332, 2147483648
    %v335 = vxor.u32 %v333, 2147483648
    %v336 = vmul.f32 %v334, 1.442695
    %v337 = vpow.pop %v336
    %v338 = vmul.f32 %v335, 1.442695
    %v339 = vpow.pop %v338
    %v340 = vadd.f32 %v337, 1.0
    %v341 = vadd.f32 %v339, 1.0
    %v342 = vrcp.pop %v340
    %v343 = vmul.f32 %v340, %v342
    %v344 = vsub.f32 1.0, %v343
    %v345 = vmul.f32 %v342, %v344
    %v346 = vadd.f32 %v342, %v345
    %vm347 = vweird.f32 %v340
    %vm348 = vweird.f32 %v342
    %vm349 = vmor %vm347, %vm348
    %v350 = vsel %vm349, %v342, %v346
    %v351 = vand.u32 2147483647, %v340
    %vm352 = vcmp.eq.f32.partialorder %v351, 8.507059e+37
    %v353 = vand.u32 %v340, 2147483648
    %v354 = vor.u32 1.1754944e-38, %v353
    %v355 = vsel %vm352, %v354, %v350
    %v356 = vmul.f32 1.0, %v355
    %v357 = vrcp.pop %v341
    %v358 = vmul.f32 %v341, %v357
    %v359 = vsub.f32 1.0, %v358
    %v360 = vmul.f32 %v357, %v359
    %v361 = vadd.f32 %v357, %v360
    %vm362 = vweird.f32 %v341
    %vm363 = vweird.f32 %v357
    %vm364 = vmor %vm362, %vm363
    %v365 = vsel %vm364, %v357, %v361
    %v366 = vand.u32 2147483647, %v341
    %vm367 = vcmp.eq.f32.partialorder %v366, 8.507059e+37
    %v368 = vand.u32 %v341, 2147483648
    %v369 = vor.u32 1.1754944e-38, %v368
    %v370 = vsel %vm367, %v369, %v365
    %v371 = vmul.f32 1.0, %v370
    %v372 = vtanh.pop %v332
    %v373 = vtanh.pop %v333
    %376 = vrot.lane.b32.xlu0 %v258, 32
    %v377 = vpop.permute.xlu0 %376
    %378 = vrot.lane.b32.xlu0 %v259, 32
    %v379 = vpop.permute.xlu0 %378
    %v382 = vmul.f32 %v356, %v377
    %v383 = vmul.f32 %v371, %v379
    %386 = vrot.lane.b32.xlu0 %v372, 64
    %v387 = vpop.permute.xlu0 %386
    %388 = vrot.lane.b32.xlu0 %v373, 64
    %v389 = vpop.permute.xlu0 %388
    %v392 = vmul.f32 %v356, %v387
    %v393 = vmul.f32 %v371, %v389
    %396 = vrot.lane.b32.xlu0 %v392, 32
    %v397 = vpop.permute.xlu0 %396
    %398 = vrot.lane.b32.xlu0 %v393, 32
    %v399 = vpop.permute.xlu0 %398
    %v402 = vadd.f32 %v382, %v397
    %v403 = vadd.f32 %v383, %v399
    %v404 = vtanh.pop %v402
    %v405 = vtanh.pop %v403
    %408 = vrot.lane.b32.xlu0 %v404, 64
    %v409 = vpop.permute.xlu0 %408
    %410 = vrot.lane.b32.xlu0 %v405, 64
    %v411 = vpop.permute.xlu0 %410
    %v414 = vmul.f32 %v356, %v409
    %v415 = vmul.f32 %v371, %v411
    %418 = vrot.lane.b32.xlu0 %v414, 32
    %v419 = vpop.permute.xlu0 %418
    %420 = vrot.lane.b32.xlu0 %v415, 32
    %v421 = vpop.permute.xlu0 %420
    %s424 = scalar_lea.vmem [#allocation8], 16
    %425 = vst.msk [vmem:[%s424] sm:$0xff] %vm102, %v419
    %426 = vst.msk [vmem:[%s424 + $0x8] sm:$0xff] %vm102, %v421
    %429 = vrot.lane.b32.xlu0 %v402, 96
    %v430 = vpop.permute.xlu0 %429
    %431 = vrot.lane.b32.xlu0 %v403, 96
    %v432 = vpop.permute.xlu0 %431
    %s435 = scalar_lea.vmem [#allocation10], 16
    %436 = vst.msk [vmem:[%s435] sm:$0xff] %vm102, %v430
    %437 = vst.msk [vmem:[%s435 + $0x8] sm:$0xff] %vm102, %v432
    %v438 = vpack.c.bf16 %v415, %v414
    %v439 = vld [vmem:[%s8] sm:$0xff]
    %v440 = vunpack.c.0.s8 %v439
    %v441 = vunpack.c.1.s8 %v439
    %v442 = vunpack.c.2.s8 %v439
    %v443 = vunpack.c.3.s8 %v439
    %v444 = vcvt.s32.f32 %v440
    %v445 = vcvt.s32.f32 %v441
    %v446 = vcvt.s32.f32 %v442
    %v447 = vcvt.s32.f32 %v443
    %v448 = vpack.c.bf16 %v445, %v444
    %v449 = vpack.c.bf16 %v447, %v446
    %451 = vrot.lane.b32.xlu0 %v438, 32
    %v452 = vpop.permute.xlu0 %451
    %v454 = vsel %vm102, %v452, 0
    %456 = vmatpush.bf16.msra.mxu0 0
    %457 = vmatpush.bf16.msra.mxu0 0
    %458 = vmatpush.bf16.msra.mxu0 0
    %459 = vmatpush.bf16.msra.mxu0 0
    %460 = vmatpush.bf16.msra.mxu0 0
    %461 = vmatpush.bf16.msra.mxu0 0
    %462 = vmatpush.bf16.msra.mxu0 %v449
    %463 = vmatpush.bf16.msra.mxu0 %v448
    %464 = vmatmul.bf16.gmra.mxu0 %v454
    %v465 = vpop.f32.mrf.mxu0
    %v466 = vadd.f32 0.0, %v465
    %v467 = vpop.f32.mrf.mxu0
    %v468 = vadd.f32 0.0, %v467
    %469 = vdwg.mxu0
    %v470 = vld [vmem:[%s9] sm:$0x1]
    %v472 = vperm.slane %v470, 0
    %v474 = vmul.f32 %v466, %v472
    %v475 = vmul.f32 %v468, %v472
    %v476 = vld [vmem:[%s10] sm:$0x1]
    %v478 = vperm.slane %v476, 0
    %v480 = vadd.f32 %v474, %v478
    %v481 = vadd.f32 %v475, %v478
    %482 = vst [vmem:[#allocation7] sm:$0xff] %v480
    %483 = vst [vmem:[#allocation7 + $0x8] sm:$0xff] %v481
    // Predicated region
    $region54: #{decoder_forward_padded.1} parent=1 // pred_check
      _
    $region55: #{decoder_forward_padded.1} parent=1 // pred_check_branch
      %485 = sbr.rel (0) target = $region57
    $region56: #{decoder_forward_padded.1} parent=1 // pred_region
      %487 = vsyncadd [#allocation4], 0
      %s488 = sshll.u32 [#allocation7], 4
      %s489 = int_to_ptr.vmem [resolvable:$true] %s488
      %s490 = sshll.u32 %s11, 4
      %s491 = int_to_ptr.hbm [resolvable:$true] %s490
      %496 = dma.vmem_to_hbm [thread:$0]  %s489, 256, %s491, [#allocation4], 128, 128, 8
    $region57: #{decoder_forward_padded.1} parent=1 // pred_fallthru
      _
    // Predicated region
    $region58: #{decoder_forward_padded.1} parent=1 // pred_check
      _
    $region59: #{decoder_forward_padded.1} parent=1 // pred_check_branch
      %498 = sbr.rel (0) target = $region61
    $region60: #{decoder_forward_padded.1} parent=1 // pred_region
      %500 = vsyncadd [#allocation9], 0
      %s501 = sshll.u32 [#allocation8], 4
      %s502 = int_to_ptr.vmem [resolvable:$true] %s501
      %s503 = sshll.u32 %s12, 4
      %s504 = int_to_ptr.hbm [resolvable:$true] %s503
      %509 = dma.vmem_to_hbm [thread:$0]  %s502, 512, %s504, [#allocation9], 128, 128, 8
    $region61: #{decoder_forward_padded.1} parent=1 // pred_fallthru
      _
    // Predicated region
    $region62: #{decoder_forward_padded.1} parent=1 // pred_check
      _
    $region63: #{decoder_forward_padded.1} parent=1 // pred_check_branch
      %511 = sbr.rel (0) target = $region65
    $region64: #{decoder_forward_padded.1} parent=1 // pred_region
      %513 = vsyncadd [#allocation9], 0
      %s514 = sshll.u32 [#allocation10], 4
      %s515 = int_to_ptr.vmem [resolvable:$true] %s514
      %s516 = sshll.u32 %s13, 4
      %s517 = int_to_ptr.hbm [resolvable:$true] %s516
      %522 = dma.vmem_to_hbm [thread:$0]  %s515, 512, %s517, [#allocation9], 128, 128, 8
    $region65: #{decoder_forward_padded.1} parent=1 // pred_fallthru
      _
    // Predicated region
    $region66: #{decoder_forward_padded.1} parent=1 // pred_check
      _
    $region67: #{decoder_forward_padded.1} parent=1 // pred_check_branch
      %524 = sbr.rel (0) target = $region69
    $region68: #{decoder_forward_padded.1} parent=1 // pred_region
      %526 = dma.done [#allocation4], 256
    $region69: #{decoder_forward_padded.1} parent=1 // pred_fallthru
      _
    // Predicated region
    $region70: #{decoder_forward_padded.1} parent=1 // pred_check
      _
    $region71: #{decoder_forward_padded.1} parent=1 // pred_check_branch
      %528 = sbr.rel (0) target = $region73
    $region72: #{decoder_forward_padded.1} parent=1 // pred_region
      %530 = dma.done [#allocation9], 512
    $region73: #{decoder_forward_padded.1} parent=1 // pred_fallthru
      _
    // Predicated region
    $region74: #{decoder_forward_padded.1} parent=1 // pred_check
      _
    $region75: #{decoder_forward_padded.1} parent=1 // pred_check_branch
      %532 = sbr.rel (0) target = $region77
    $region76: #{decoder_forward_padded.1} parent=1 // pred_region
      %534 = dma.done [#allocation9], 512
    $region77: #{decoder_forward_padded.1} parent=1 // pred_fallthru
      _
    %535 = vsyncpa [#allocation3], 1
    %536 = vsyncpa [#allocation6], 1
    %537 = vsyncpa [#allocation4], 1
    %538 = vsyncpa [#allocation9], 1

</llo_original>
